<compile_context>
chip_gen: v7x
topology: tpu7x:2x2x1
jax: 0.10.0
libtpu: 0.0.40
codegen_flags: <defaults>
</compile_context>

<pallas_src>
import jax
import jax.numpy as jnp
from jax.experimental import pallas as pl
from jax.experimental.pallas import tpu as pltpu

N_MELS = 16
HIDDEN = 32
OUT_DIM = 32
K = 3                        # kernel size of the two "wide" convs
CONTEXT = 2 * (K - 1)        # streaming buffer length = receptive field - 1
HOP_LENGTH = 256             # TracedMelEncoder.hop_length (metadata only)
LEAK = 0.1


def _mel_encoder_kernel(x_ref, w1_ref, b1_ref, w2_ref, b2_ref, w3_ref, b3_ref,
                        o_ref):
    """One lane-dense slab per grid step: x_ref is (N_MELS, Lblk), Lblk = Bblk*T_in.

    Each batch element occupies a contiguous span of T_in lanes
    ([CONTEXT cache cols | T chunk cols]); the sliding-window taps wrap / cross
    batch spans only in each span's trailing CONTEXT columns, which the wrapper
    discards, so validity is preserved.
    """
    mxu_dt = w1_ref.dtype
    x = x_ref[...]                                   # (N_MELS, L), already mxu_dt

    def taps(h):
        # Rows [k*C + c] = h[c, t + k]; the wrapped tail columns are garbage that
        # only ever lands in the discarded per-batch CONTEXT tail.
        parts = [h]
        for k in range(1, K):
            parts.append(jnp.concatenate([h[:, k:], h[:, :k]], axis=1))
        return jnp.concatenate(parts, axis=0)        # (K*C, L)

    # conv1: single MXU matmul, contraction depth K*N_MELS = 48.
    h1 = jnp.dot(w1_ref[...], taps(x),
                 preferred_element_type=jnp.float32) + b1_ref[...]
    h1 = jnp.where(h1 > 0, h1, LEAK * h1)

    # conv2: single MXU matmul, contraction depth K*HIDDEN = 96.
    h2 = jnp.dot(w2_ref[...], taps(h1.astype(mxu_dt)),
                 preferred_element_type=jnp.float32) + b2_ref[...]
    h2 = jnp.where(h2 > 0, h2, LEAK * h2)

    # conv3: 1x1 projection head.
    out = jnp.dot(w3_ref[...], h2.astype(mxu_dt),
                  preferred_element_type=jnp.float32) + b3_ref[...]
    o_ref[...] = out.astype(o_ref.dtype)


def _prep_params(params, mxu_dtype):
    """Flatten PyTorch Conv1d weights (O, C, K) -> (O, K*C) so no tap slicing
    happens inside the kernel; row order matches taps() (tap-major, channel-minor)."""
    w1, b1, w2, b2, w3, b3 = params
    w1f = jnp.transpose(w1, (0, 2, 1)).reshape(HIDDEN, K * N_MELS).astype(mxu_dtype)
    w2f = jnp.transpose(w2, (0, 2, 1)).reshape(HIDDEN, K * HIDDEN).astype(mxu_dtype)
    w3f = w3[:, :, 0].astype(mxu_dtype)
    b1 = b1.reshape(HIDDEN, 1).astype(jnp.float32)
    b2 = b2.reshape(HIDDEN, 1).astype(jnp.float32)
    b3 = b3.reshape(OUT_DIM, 1).astype(jnp.float32)
    return w1f, b1, w2f, b2, w3f, b3


def _pick_grid(B, T_in):
    """>=2 parallel grid steps keep both v7x TensorCores busy, but only when each
    chunk's lane width stays batch-aligned and 128-divisible (BlockSpec rule)."""
    for g in (4, 2):
        if B % g == 0 and ((B // g) * T_in) % 128 == 0:
            return g
    return 1


def traced_mel_encoder(x, params, cache, *, use_buffer=True,
                       mxu_dtype=jnp.float32):
    """x: (B, N_MELS, T) mel chunk.  cache: (B, N_MELS, CONTEXT) streaming context.

    Returns (out, new_cache):
      out:       (B, OUT_DIM, T)        (T - CONTEXT if use_buffer=False)
      new_cache: (B, N_MELS, CONTEXT)   functional replacement of the stateful buffer
    """
    B, C, T = x.shape
    assert C == N_MELS, (C, N_MELS)

    if use_buffer:
        x_cat = jnp.concatenate([cache, x], axis=-1)       # (B, C, T_in)
        new_cache = x_cat[..., -CONTEXT:]                  # functional cache update
    else:
        x_cat = x
        new_cache = cache
    T_in = x_cat.shape[-1]
    T_out = T_in - 2 * (K - 1)

    # Lane-dense slab: (C, B*T_in) — batch*time rides the 128-lane axis.
    x_flat = jnp.transpose(x_cat, (1, 0, 2)).reshape(C, B * T_in).astype(mxu_dtype)
    w1f, b1, w2f, b2, w3f, b3 = _prep_params(params, mxu_dtype)

    L = B * T_in
    G = _pick_grid(B, T_in)
    Lblk = L // G

    out_flat = pl.pallas_call(
        _mel_encoder_kernel,
        out_shape=jax.ShapeDtypeStruct((OUT_DIM, L), jnp.float32),
        grid_spec=pltpu.PrefetchScalarGridSpec(
            num_scalar_prefetch=0,
            grid=(G,),
            in_specs=[
                pl.BlockSpec((N_MELS, Lblk), lambda i: (0, i)),          # x slab
                pl.BlockSpec((HIDDEN, K * N_MELS), lambda i: (0, 0)),    # w1 (flat)
                pl.BlockSpec((HIDDEN, 1), lambda i: (0, 0)),             # b1
                pl.BlockSpec((HIDDEN, K * HIDDEN), lambda i: (0, 0)),    # w2 (flat)
                pl.BlockSpec((HIDDEN, 1), lambda i: (0, 0)),             # b2
                pl.BlockSpec((OUT_DIM, HIDDEN), lambda i: (0, 0)),       # w3
                pl.BlockSpec((OUT_DIM, 1), lambda i: (0, 0)),            # b3
            ],
            out_specs=pl.BlockSpec((OUT_DIM, Lblk), lambda i: (0, i)),
        ),
        compiler_params=pltpu.CompilerParams(
            dimension_semantics=("parallel",)),
    )(x_flat, w1f, b1, w2f, b2, w3f, b3)

    # (OUT, L) -> (B, OUT, T_out): drop each batch element's wrapped/cross-batch
    # tail columns (exactly the CONTEXT trailing frames of every T_in span).
    out = out_flat.reshape(OUT_DIM, B, T_in)[:, :, :T_out]
    out = jnp.transpose(out, (1, 0, 2))
    # TODO(synk): hop_length is audio<->frame bookkeeping in the PyTorch wrapper;
    # no compute to translate.
    return out, new_cache


def _reference(x, params, cache):
    """Pure-JAX reference (tap-wise valid conv, PyTorch-layout weights)."""
    w1, b1, w2, b2, w3, b3 = params
    x = jnp.concatenate([cache, x], axis=-1)

    def conv(h, w, b):
        kk = w.shape[-1]
        t_out = h.shape[-1] - (kk - 1)
        acc = jnp.zeros((h.shape[0], w.shape[0], t_out), jnp.float32)
        for k in range(kk):
            acc += jnp.einsum('oc,bct->bot', w[:, :, k], h[:, :, k:k + t_out])
        return acc + b[None, :, :]

    h = conv(x, w1, b1)
    h = jnp.where(h > 0, h, LEAK * h)
    h = conv(h, w2, b2)
    h = jnp.where(h > 0, h, LEAK * h)
    return conv(h, w3, b3)


def _init_params(key):
    """Deterministic synthetic weights (PyTorch Conv1d layout: (O, C, K))."""
    ks = jax.random.split(key, 6)
    scale = 0.1
    w1 = scale * jax.random.normal(ks[0], (HIDDEN, N_MELS, K), jnp.float32)
    b1 = scale * jax.random.normal(ks[1], (HIDDEN, 1), jnp.float32)
    w2 = scale * jax.random.normal(ks[2], (HIDDEN, HIDDEN, K), jnp.float32)
    b2 = scale * jax.random.normal(ks[3], (HIDDEN, 1), jnp.float32)
    w3 = scale * jax.random.normal(ks[4], (OUT_DIM, HIDDEN, 1), jnp.float32)
    b3 = scale * jax.random.normal(ks[5], (OUT_DIM, 1), jnp.float32)
    return (w1, b1, w2, b2, w3, b3)


if __name__ == "__main__":
    key = jax.random.PRNGKey(0)
    k_x, k_cache, k_p = jax.random.split(key, 3)

    B, T = 2, 16
    x = jax.random.normal(k_x, (B, N_MELS, T), jnp.float32)           # mel chunk
    cache = jax.random.normal(k_cache, (B, N_MELS, CONTEXT), jnp.float32)
    params = _init_params(k_p)

    out, new_cache = traced_mel_encoder(x, params, cache, use_buffer=True)
    out = jax.block_until_ready(out)

    assert out.shape == (B, OUT_DIM, T), out.shape
    assert new_cache.shape == (B, N_MELS, CONTEXT), new_cache.shape

    ref = jax.block_until_ready(_reference(x, params, cache))
    err = jnp.max(jnp.abs(out - ref))
    assert jnp.allclose(out, ref, atol=2e-4, rtol=2e-4), f"mismatch vs reference: {err}"

    print("KERNEL_OK")
</pallas_src>

<mosaic_0001>
module attributes {stable_mosaic.version = 11 : i64} {
  func.func @_mel_encoder_kernel(%arg0: i32, %arg1: memref<16x40xf32, #tpu.memory_space<vmem>>, %arg2: memref<32x48xf32, #tpu.memory_space<vmem>>, %arg3: memref<32x1xf32, #tpu.memory_space<vmem>>, %arg4: memref<32x96xf32, #tpu.memory_space<vmem>>, %arg5: memref<32x1xf32, #tpu.memory_space<vmem>>, %arg6: memref<32x32xf32, #tpu.memory_space<vmem>>, %arg7: memref<32x1xf32, #tpu.memory_space<vmem>>, %arg8: memref<32x40xf32, #tpu.memory_space<vmem>>) attributes {dimension_semantics = [#tpu.dimension_semantics<parallel>], iteration_bounds = array<i64: 1>, scalar_prefetch = 0 : i64, scratch_operands = 0 : i64, tpu.core_type = #tpu.core_type<tc>, window_params = [{transform_indices = @transform_0, window_bounds = array<i64: 16, 40>}, {pipeline_mode = #tpu.pipeline_mode<synchronous>, transform_indices = @transform_1, window_bounds = array<i64: 32, 48>}, {pipeline_mode = #tpu.pipeline_mode<synchronous>, transform_indices = @transform_2, window_bounds = array<i64: 32, 1>}, {pipeline_mode = #tpu.pipeline_mode<synchronous>, transform_indices = @transform_3, window_bounds = array<i64: 32, 96>}, {pipeline_mode = #tpu.pipeline_mode<synchronous>, transform_indices = @transform_4, window_bounds = array<i64: 32, 1>}, {pipeline_mode = #tpu.pipeline_mode<synchronous>, transform_indices = @transform_5, window_bounds = array<i64: 32, 32>}, {pipeline_mode = #tpu.pipeline_mode<synchronous>, transform_indices = @transform_6, window_bounds = array<i64: 32, 1>}, {transform_indices = @transform_7, window_bounds = array<i64: 32, 40>}]} {
    %c0 = arith.constant 0 : index
    %c0_0 = arith.constant 0 : index
    %0 = vector.load %arg1[%c0, %c0_0] : memref<16x40xf32, #tpu.memory_space<vmem>>, vector<16x40xf32>
    %c0_1 = arith.constant 0 : index
    %c0_2 = arith.constant 0 : index
    %1 = vector.load %arg2[%c0_1, %c0_2] : memref<32x48xf32, #tpu.memory_space<vmem>>, vector<32x48xf32>
    %2 = vector.extract_strided_slice %0 {offsets = [0, 1], sizes = [16, 39], strides = [1, 1]} : vector<16x40xf32> to vector<16x39xf32>
    %3 = vector.extract_strided_slice %0 {offsets = [0, 0], sizes = [16, 1], strides = [1, 1]} : vector<16x40xf32> to vector<16x1xf32>
    %4 = tpu.concatenate %2, %3 in 1 : vector<16x39xf32>, vector<16x1xf32> -> vector<16x40xf32>
    %5 = vector.extract_strided_slice %0 {offsets = [0, 2], sizes = [16, 38], strides = [1, 1]} : vector<16x40xf32> to vector<16x38xf32>
    %6 = vector.extract_strided_slice %0 {offsets = [0, 0], sizes = [16, 2], strides = [1, 1]} : vector<16x40xf32> to vector<16x2xf32>
    %7 = tpu.concatenate %5, %6 in 1 : vector<16x38xf32>, vector<16x2xf32> -> vector<16x40xf32>
    %8 = tpu.concatenate %0, %4, %7 in 0 : vector<16x40xf32>, vector<16x40xf32>, vector<16x40xf32> -> vector<48x40xf32>
    %cst = arith.constant dense<0.000000e+00> : vector<32x40xf32>
    %9 = tpu.matmul %1, %8, %cst {dimension_numbers = #tpu.dot_dimension_numbers<[1], [0], [0], [1], [0, 0, 1, 1], [], []>} : vector<32x48xf32>, vector<48x40xf32>, vector<32x40xf32> -> vector<32x40xf32>
    %c0_3 = arith.constant 0 : index
    %c0_4 = arith.constant 0 : index
    %10 = vector.load %arg3[%c0_3, %c0_4] : memref<32x1xf32, #tpu.memory_space<vmem>>, vector<32x1xf32>
    %11 = vector.broadcast %10 : vector<32x1xf32> to vector<32x40xf32>
    %12 = arith.addf %9, %11 : vector<32x40xf32>
    %cst_5 = arith.constant 0.000000e+00 : f32
    %13 = vector.broadcast %cst_5 : f32 to vector<32x40xf32>
    %14 = arith.cmpf ogt, %12, %13 : vector<32x40xf32>
    %cst_6 = arith.constant 1.000000e-01 : f32
    %15 = vector.broadcast %cst_6 : f32 to vector<32x40xf32>
    %16 = arith.mulf %15, %12 : vector<32x40xf32>
    %17 = arith.select %14, %12, %16 : vector<32x40xi1>, vector<32x40xf32>
    %c0_7 = arith.constant 0 : index
    %c0_8 = arith.constant 0 : index
    %18 = vector.load %arg4[%c0_7, %c0_8] : memref<32x96xf32, #tpu.memory_space<vmem>>, vector<32x96xf32>
    %19 = vector.extract_strided_slice %17 {offsets = [0, 1], sizes = [32, 39], strides = [1, 1]} : vector<32x40xf32> to vector<32x39xf32>
    %20 = vector.extract_strided_slice %17 {offsets = [0, 0], sizes = [32, 1], strides = [1, 1]} : vector<32x40xf32> to vector<32x1xf32>
    %21 = tpu.concatenate %19, %20 in 1 : vector<32x39xf32>, vector<32x1xf32> -> vector<32x40xf32>
    %22 = vector.extract_strided_slice %17 {offsets = [0, 2], sizes = [32, 38], strides = [1, 1]} : vector<32x40xf32> to vector<32x38xf32>
    %23 = vector.extract_strided_slice %17 {offsets = [0, 0], sizes = [32, 2], strides = [1, 1]} : vector<32x40xf32> to vector<32x2xf32>
    %24 = tpu.concatenate %22, %23 in 1 : vector<32x38xf32>, vector<32x2xf32> -> vector<32x40xf32>
    %25 = tpu.concatenate %17, %21, %24 in 0 : vector<32x40xf32>, vector<32x40xf32>, vector<32x40xf32> -> vector<96x40xf32>
    %cst_9 = arith.constant dense<0.000000e+00> : vector<32x40xf32>
    %26 = tpu.matmul %18, %25, %cst_9 {dimension_numbers = #tpu.dot_dimension_numbers<[1], [0], [0], [1], [0, 0, 1, 1], [], []>} : vector<32x96xf32>, vector<96x40xf32>, vector<32x40xf32> -> vector<32x40xf32>
    %c0_10 = arith.constant 0 : index
    %c0_11 = arith.constant 0 : index
    %27 = vector.load %arg5[%c0_10, %c0_11] : memref<32x1xf32, #tpu.memory_space<vmem>>, vector<32x1xf32>
    %28 = vector.broadcast %27 : vector<32x1xf32> to vector<32x40xf32>
    %29 = arith.addf %26, %28 : vector<32x40xf32>
    %cst_12 = arith.constant 0.000000e+00 : f32
    %30 = vector.broadcast %cst_12 : f32 to vector<32x40xf32>
    %31 = arith.cmpf ogt, %29, %30 : vector<32x40xf32>
    %cst_13 = arith.constant 1.000000e-01 : f32
    %32 = vector.broadcast %cst_13 : f32 to vector<32x40xf32>
    %33 = arith.mulf %32, %29 : vector<32x40xf32>
    %34 = arith.select %31, %29, %33 : vector<32x40xi1>, vector<32x40xf32>
    %c0_14 = arith.constant 0 : index
    %c0_15 = arith.constant 0 : index
    %35 = vector.load %arg6[%c0_14, %c0_15] : memref<32x32xf32, #tpu.memory_space<vmem>>, vector<32x32xf32>
    %cst_16 = arith.constant dense<0.000000e+00> : vector<32x40xf32>
    %36 = tpu.matmul %35, %34, %cst_16 {dimension_numbers = #tpu.dot_dimension_numbers<[1], [0], [0], [1], [0, 0, 1, 1], [], []>} : vector<32x32xf32>, vector<32x40xf32>, vector<32x40xf32> -> vector<32x40xf32>
    %c0_17 = arith.constant 0 : index
    %c0_18 = arith.constant 0 : index
    %37 = vector.load %arg7[%c0_17, %c0_18] : memref<32x1xf32, #tpu.memory_space<vmem>>, vector<32x1xf32>
    %38 = vector.broadcast %37 : vector<32x1xf32> to vector<32x40xf32>
    %39 = arith.addf %36, %38 : vector<32x40xf32>
    %c0_19 = arith.constant 0 : index
    %c0_20 = arith.constant 0 : index
    %40 = vector.load %arg8[%c0_19, %c0_20] : memref<32x40xf32, #tpu.memory_space<vmem>>, vector<32x40xf32>
    tpu.vector_store %arg8[%c0_19, %c0_20], %39 {strides = array<i32>} : memref<32x40xf32, #tpu.memory_space<vmem>>, vector<32x40xf32>,
    return
  }
  func.func @transform_0(%arg0: i32) -> (i32, i32) {
    %c0_i32 = arith.constant 0 : i32
    %c0_i32_0 = arith.constant 0 : i32
    return %c0_i32, %arg0 : i32, i32
  }
  func.func @transform_1(%arg0: i32) -> (i32, i32) {
    %c0_i32 = arith.constant 0 : i32
    %c0_i32_0 = arith.constant 0 : i32
    %c0_i32_1 = arith.constant 0 : i32
    return %c0_i32, %c0_i32_0 : i32, i32
  }
  func.func @transform_2(%arg0: i32) -> (i32, i32) {
    %c0_i32 = arith.constant 0 : i32
    %c0_i32_0 = arith.constant 0 : i32
    %c0_i32_1 = arith.constant 0 : i32
    return %c0_i32, %c0_i32_0 : i32, i32
  }
  func.func @transform_3(%arg0: i32) -> (i32, i32) {
    %c0_i32 = arith.constant 0 : i32
    %c0_i32_0 = arith.constant 0 : i32
    %c0_i32_1 = arith.constant 0 : i32
    return %c0_i32, %c0_i32_0 : i32, i32
  }
  func.func @transform_4(%arg0: i32) -> (i32, i32) {
    %c0_i32 = arith.constant 0 : i32
    %c0_i32_0 = arith.constant 0 : i32
    %c0_i32_1 = arith.constant 0 : i32
    return %c0_i32, %c0_i32_0 : i32, i32
  }
  func.func @transform_5(%arg0: i32) -> (i32, i32) {
    %c0_i32 = arith.constant 0 : i32
    %c0_i32_0 = arith.constant 0 : i32
    %c0_i32_1 = arith.constant 0 : i32
    return %c0_i32, %c0_i32_0 : i32, i32
  }
  func.func @transform_6(%arg0: i32) -> (i32, i32) {
    %c0_i32 = arith.constant 0 : i32
    %c0_i32_0 = arith.constant 0 : i32
    %c0_i32_1 = arith.constant 0 : i32
    return %c0_i32, %c0_i32_0 : i32, i32
  }
  func.func @transform_7(%arg0: i32) -> (i32, i32) {
    %c0_i32 = arith.constant 0 : i32
    %c0_i32_0 = arith.constant 0 : i32
    return %c0_i32, %arg0 : i32, i32
  }
}

</mosaic_0001>

<llo_original>
// kernel: tpu_custom_call.1
$region0: #{tpu_custom_call.1}
  #allocation0 [shape = 'u32[]', space=smem, size = 0x4, offset = 0x4, fixed_abs, tag = 'smem constant byte address 0x4 - core index']
  #allocation1 [shape = 'u32[144,128]{1,0:T(1,128)}', space=vmem, size = 0x12000, scoped, tag = 'internal scratch']
  %s0 = inlined_call_operand.hbm [shape: f32[16,40], index: 0, kind: input, shape index: {}]
  %s1 = inlined_call_operand.vmem [shape: f32[32,48], index: 1, kind: input, shape index: {}]
  %s2 = inlined_call_operand.vmem [shape: f32[32,1], index: 2, kind: input, shape index: {}]
  %s3 = inlined_call_operand.vmem [shape: f32[32,96], index: 3, kind: input, shape index: {}]
  %s4 = inlined_call_operand.vmem [shape: f32[32,1], index: 4, kind: input, shape index: {}]
  %s5 = inlined_call_operand.vmem [shape: f32[32,32], index: 5, kind: input, shape index: {}]
  %s6 = inlined_call_operand.vmem [shape: f32[32,1], index: 6, kind: input, shape index: {}]
  %s7 = inlined_call_operand.hbm [shape: f32[32,40], index: 7, kind: output, shape index: {}]
  %s8 = sld [smem:[#allocation0]]
  $region42: #{tpu_custom_call.1} parent=0
    _
  %s10 = ssub.s32 1, %s8
  %s11 = scalar_select 0, %s10, %s8
  $region1: #{tpu_custom_call.1} parent=0
    #allocation2 [shape = 'u8[8192]{0}', space=vmem, size = 0x2000, scoped, tag = 'input window, operand 0, single buffered']
    #allocation3 [shape = 's32[1]{0}', space=sflag, size = 0x4, scoped, tag = 'scoped memory for tpu_custom_call.1']
    #allocation4 [shape = 's32[1]{0}', space=sflag, size = 0x4, scoped, tag = 'scoped memory for tpu_custom_call.1']
    #allocation5 [shape = 'u8[16384]{0}', space=vmem, size = 0x4000, scoped, tag = 'output window, operand 0, single buffered']
    %12 = vsyncpa [#allocation3], 0
    %13 = vsyncpa [#allocation4], 0
    // Predicated region
    $region2: #{tpu_custom_call.1} parent=1 // pred_check
      _
    $region3: #{tpu_custom_call.1} parent=1 // pred_check_branch
      %15 = sbr.rel (0) target = $region5
    $region4: #{tpu_custom_call.1} parent=1 // pred_region
      %s17 = ssub.s32 256, 256
      %18 = vsyncadd [#allocation3], %s17
      %s19 = sshll.u32 [#allocation2], 4
      %s20 = int_to_ptr.vmem [resolvable:$true] %s19
      %25 = dma.hbm_to_vmem [thread:$0]  %s0, 256, %s20, [#allocation3], 128, 128, 8
    $region5: #{tpu_custom_call.1} parent=1 // pred_fallthru
      _
    // Predicated region
    $region6: #{tpu_custom_call.1} parent=1 // pred_check
      _
    $region7: #{tpu_custom_call.1} parent=1 // pred_check_branch
      %27 = sbr.rel (0) target = $region9
    $region8: #{tpu_custom_call.1} parent=1 // pred_region
      _
    $region9: #{tpu_custom_call.1} parent=1 // pred_fallthru
      _
    // Predicated region
    $region10: #{tpu_custom_call.1} parent=1 // pred_check
      _
    $region11: #{tpu_custom_call.1} parent=1 // pred_check_branch
      %29 = sbr.rel (0) target = $region13
    $region12: #{tpu_custom_call.1} parent=1 // pred_region
      _
    $region13: #{tpu_custom_call.1} parent=1 // pred_fallthru
      _
    // Predicated region
    $region14: #{tpu_custom_call.1} parent=1 // pred_check
      _
    $region15: #{tpu_custom_call.1} parent=1 // pred_check_branch
      %31 = sbr.rel (0) target = $region17
    $region16: #{tpu_custom_call.1} parent=1 // pred_region
      _
    $region17: #{tpu_custom_call.1} parent=1 // pred_fallthru
      _
    // Predicated region
    $region18: #{tpu_custom_call.1} parent=1 // pred_check
      _
    $region19: #{tpu_custom_call.1} parent=1 // pred_check_branch
      %33 = sbr.rel (0) target = $region21
    $region20: #{tpu_custom_call.1} parent=1 // pred_region
      _
    $region21: #{tpu_custom_call.1} parent=1 // pred_fallthru
      _
    // Predicated region
    $region22: #{tpu_custom_call.1} parent=1 // pred_check
      _
    $region23: #{tpu_custom_call.1} parent=1 // pred_check_branch
      %35 = sbr.rel (0) target = $region25
    $region24: #{tpu_custom_call.1} parent=1 // pred_region
      _
    $region25: #{tpu_custom_call.1} parent=1 // pred_fallthru
      _
    // Predicated region
    $region26: #{tpu_custom_call.1} parent=1 // pred_check
      _
    $region27: #{tpu_custom_call.1} parent=1 // pred_check_branch
      %37 = sbr.rel (0) target = $region29
    $region28: #{tpu_custom_call.1} parent=1 // pred_region
      _
    $region29: #{tpu_custom_call.1} parent=1 // pred_fallthru
      _
    // Predicated region
    $region30: #{tpu_custom_call.1} parent=1 // pred_check
      _
    $region31: #{tpu_custom_call.1} parent=1 // pred_check_branch
      %39 = sbr.rel (0) target = $region33
    $region32: #{tpu_custom_call.1} parent=1 // pred_region
      %40 = dma.done [#allocation3], 256
    $region33: #{tpu_custom_call.1} parent=1 // pred_fallthru
      _
    %v41 = vld [vmem:[#allocation2] sm:$0xff]
    %v42 = vld [vmem:[#allocation2 + $0x8] sm:$0xff]
    %v43 = vld [vmem:[%s1] sm:$0xff]
    %v44 = vld [vmem:[%s1 + $0x8] sm:$0xff]
    %v45 = vld [vmem:[%s1 + $0x10] sm:$0xff]
    %v46 = vld [vmem:[%s1 + $0x18] sm:$0xff]
    %49 = vrot.lane.b32.xlu0 %v41, 127
    %v50 = vpop.permute.xlu0 %49
    %51 = vrot.lane.b32.xlu0 %v42, 127
    %v52 = vpop.permute.xlu0 %51
    %55 = vrot.lane.b32.xlu0 %v41, 39
    %v56 = vpop.permute.xlu0 %55
    %57 = vrot.lane.b32.xlu0 %v42, 39
    %v58 = vpop.permute.xlu0 %57
    %vm61 = vcmask 318464
    %v62 = vsel %vm61, %v50, %v56
    %v63 = vsel %vm61, %v52, %v58
    %64 = vrot.lane.b32.xlu0 %v41, 126
    %v65 = vpop.permute.xlu0 %64
    %66 = vrot.lane.b32.xlu0 %v42, 126
    %v67 = vpop.permute.xlu0 %66
    %70 = vrot.lane.b32.xlu0 %v41, 38
    %v71 = vpop.permute.xlu0 %70
    %72 = vrot.lane.b32.xlu0 %v42, 38
    %v73 = vpop.permute.xlu0 %72
    %vm76 = vcmask 310272
    %v77 = vsel %vm76, %v65, %v71
    %v78 = vsel %vm76, %v67, %v73
    %v79 = vld [vmem:[%s2] sm:$0xff]
    %v80 = vld [vmem:[%s2 + $0x8] sm:$0xff]
    %v81 = vld [vmem:[%s2 + $0x10] sm:$0xff]
    %v82 = vld [vmem:[%s2 + $0x18] sm:$0xff]
    %84 = vset.pattern.permute.xlu0 0
    %85 = vperm.xlu0 %84, %v79
    %v86 = vpop.permute.xlu0 %85
    %89 = vset.pattern.permute.xlu0 0
    %90 = vperm.xlu0 %89, %v80
    %v91 = vpop.permute.xlu0 %90
    %94 = vset.pattern.permute.xlu0 0
    %95 = vperm.xlu0 %94, %v81
    %v96 = vpop.permute.xlu0 %95
    %99 = vset.pattern.permute.xlu0 0
    %100 = vperm.xlu0 %99, %v82
    %v101 = vpop.permute.xlu0 %100
    %vm103 = vcmask 392192
    %v105 = vsel %vm103, %v43, 0
    %v108 = vsel %vm103, %v44, 0
    %v111 = vsel %vm103, %v45, 0
    %v114 = vsel %vm103, %v46, 0
    %116 = vmatprep.subr.mxu0 0.0
    %117 = vmatpush1.msra.mxu0 %v41
    %118 = vmatprep.subr.mxu0 0.0
    %119 = vmatpush1.msra.mxu0 %v42
    %120 = vmatprep.subr.mxu0 0.0
    %121 = vmatpush1.msra.mxu0 %v62
    %122 = vmatprep.subr.mxu0 0.0
    %123 = vmatpush1.msra.mxu0 %v63
    %124 = vmatprep.subr.mxu0 0.0
    %125 = vmatpush1.msra.mxu0 %v77
    %126 = vmatprep.subr.mxu0 0.0
    %127 = vmatpush1.msra.mxu0 %v78
    %128 = vmatprep.subr.mxu0 0.0
    %129 = vmatpush1.msra.mxu0 0.0
    %130 = vmatprep.subr.mxu0 0.0
    %131 = vmatpush1.msra.mxu0 0.0
    %132 = vmatprep.subr.mxu0 0.0
    %133 = vmatpush1.msra.mxu0 0.0
    %134 = vmatprep.subr.mxu0 0.0
    %135 = vmatpush1.msra.mxu0 0.0
    %136 = vmatprep.subr.mxu0 0.0
    %137 = vmatpush1.msra.mxu0 0.0
    %138 = vmatprep.subr.mxu0 0.0
    %139 = vmatpush1.msra.mxu0 0.0
    %140 = vmatprep.subr.mxu0 0.0
    %141 = vmatpush1.msra.mxu0 0.0
    %142 = vmatprep.subr.mxu0 0.0
    %143 = vmatpush1.msra.mxu0 0.0
    %144 = vmatprep.subr.mxu0 0.0
    %145 = vmatpush1.msra.mxu0 0.0
    %146 = vmatprep.subr.mxu0 0.0
    %147 = vmatpush1.msra.mxu0 0.0
    %148 = vmatprep.subr.mxu0 0.0
    %149 = vmatpush1.msra.mxu0 0.0
    %150 = vmatprep.subr.mxu0 0.0
    %151 = vmatpush1.msra.mxu0 0.0
    %152 = vmatprep.subr.mxu0 0.0
    %153 = vmatpush1.msra.mxu0 0.0
    %154 = vmatprep.subr.mxu0 0.0
    %155 = vmatpush1.msra.mxu0 0.0
    %156 = vmatprep.subr.mxu0 0.0
    %157 = vmatpush1.msra.mxu0 0.0
    %158 = vmatprep.subr.mxu0 0.0
    %159 = vmatpush1.msra.mxu0 0.0
    %160 = vmatprep.subr.mxu0 0.0
    %161 = vmatpush1.msra.mxu0 0.0
    %162 = vmatprep.subr.mxu0 0.0
    %163 = vmatpush1.msra.mxu0 0.0
    %164 = vmatprep.subr.mxu0 0.0
    %165 = vmatpush1.msra.mxu0 0.0
    %166 = vmatprep.subr.mxu0 0.0
    %167 = vmatpush1.msra.mxu0 0.0
    %168 = vmatprep.subr.mxu0 0.0
    %169 = vmatpush1.msra.mxu0 0.0
    %170 = vmatprep.subr.mxu0 0.0
    %171 = vmatpush1.msra.mxu0 0.0
    %172 = vmatprep.subr.mxu0 0.0
    %173 = vmatpush1.msra.mxu0 0.0
    %174 = vmatprep.subr.mxu0 0.0
    %175 = vmatpush1.msra.mxu0 0.0
    %176 = vmatprep.subr.mxu0 0.0
    %177 = vmatpush1.msra.mxu0 0.0
    %178 = vmatprep.subr.mxu0 0.0
    %179 = vmatpush1.msra.mxu0 0.0
    %180 = vmatprep.mubr.f32.mxu0 0.0
    %181 = vmatmul.mubr.f32.gmra.mrb[0].mxu0 %v105
    %v182 = vpop.f32.mrb[0].mxu0
    %v183 = vadd.f32 %v86, %v182
    %v184 = vpop.f32.mrb[0].mxu0
    %185 = vmatprep.mubr.f32.mxu0 0.0
    %186 = vmatmul.mubr.f32.gmra.mrb[0].mxu0 %v108
    %v187 = vpop.f32.mrb[0].mxu0
    %v188 = vadd.f32 %v91, %v187
    %v189 = vpop.f32.mrb[0].mxu0
    %190 = vmatprep.mubr.f32.mxu0 0.0
    %191 = vmatmul.mubr.f32.gmra.mrb[0].mxu0 %v111
    %v192 = vpop.f32.mrb[0].mxu0
    %v193 = vadd.f32 %v96, %v192
    %v194 = vpop.f32.mrb[0].mxu0
    %195 = vmatprep.mubr.f32.mxu0 0.0
    %196 = vmatmul.mubr.f32.gmra.mrb[0].mxu0 %v114
    %v197 = vpop.f32.mrb[0].mxu0
    %v198 = vadd.f32 %v101, %v197
    %v199 = vpop.f32.mrb[0].mxu0
    %200 = vdwg.mxu0
    %vm201 = vcmp.gt.f32.partialorder %v183, 0.0
    %vm202 = vcmp.gt.f32.partialorder %v188, 0.0
    %vm203 = vcmp.gt.f32.partialorder %v193, 0.0
    %vm204 = vcmp.gt.f32.partialorder %v198, 0.0
    %v205 = vmul.f32 %v183, 0.1
    %v206 = vmul.f32 %v188, 0.1
    %v207 = vmul.f32 %v193, 0.1
    %v208 = vmul.f32 %v198, 0.1
    %v209 = vsel %vm201, %v183, %v205
    %v210 = vsel %vm202, %v188, %v206
    %v211 = vsel %vm203, %v193, %v207
    %v212 = vsel %vm204, %v198, %v208
    %v213 = vld [vmem:[%s3] sm:$0xff]
    %v214 = vld [vmem:[%s3 + $0x8] sm:$0xff]
    %v215 = vld [vmem:[%s3 + $0x10] sm:$0xff]
    %v216 = vld [vmem:[%s3 + $0x18] sm:$0xff]
    %221 = vrot.lane.b32.xlu0 %v209, 127
    %v222 = vpop.permute.xlu0 %221
    %223 = vrot.lane.b32.xlu0 %v210, 127
    %v224 = vpop.permute.xlu0 %223
    %225 = vrot.lane.b32.xlu0 %v211, 127
    %v226 = vpop.permute.xlu0 %225
    %227 = vrot.lane.b32.xlu0 %v212, 127
    %v228 = vpop.permute.xlu0 %227
    %233 = vrot.lane.b32.xlu0 %v209, 39
    %v234 = vpop.permute.xlu0 %233
    %235 = vrot.lane.b32.xlu0 %v210, 39
    %v236 = vpop.permute.xlu0 %235
    %237 = vrot.lane.b32.xlu0 %v211, 39
    %v238 = vpop.permute.xlu0 %237
    %239 = vrot.lane.b32.xlu0 %v212, 39
    %v240 = vpop.permute.xlu0 %239
    %v245 = vsel %vm61, %v222, %v234
    %v246 = vsel %vm61, %v224, %v236
    %v247 = vsel %vm61, %v226, %v238
    %v248 = vsel %vm61, %v228, %v240
    %249 = vrot.lane.b32.xlu0 %v209, 126
    %v250 = vpop.permute.xlu0 %249
    %251 = vrot.lane.b32.xlu0 %v210, 126
    %v252 = vpop.permute.xlu0 %251
    %253 = vrot.lane.b32.xlu0 %v211, 126
    %v254 = vpop.permute.xlu0 %253
    %255 = vrot.lane.b32.xlu0 %v212, 126
    %v256 = vpop.permute.xlu0 %255
    %261 = vrot.lane.b32.xlu0 %v209, 38
    %v262 = vpop.permute.xlu0 %261
    %263 = vrot.lane.b32.xlu0 %v210, 38
    %v264 = vpop.permute.xlu0 %263
    %265 = vrot.lane.b32.xlu0 %v211, 38
    %v266 = vpop.permute.xlu0 %265
    %267 = vrot.lane.b32.xlu0 %v212, 38
    %v268 = vpop.permute.xlu0 %267
    %v273 = vsel %vm76, %v250, %v262
    %v274 = vsel %vm76, %v252, %v264
    %v275 = vsel %vm76, %v254, %v266
    %v276 = vsel %vm76, %v256, %v268
    %v277 = vld [vmem:[%s4] sm:$0xff]
    %v278 = vld [vmem:[%s4 + $0x8] sm:$0xff]
    %v279 = vld [vmem:[%s4 + $0x10] sm:$0xff]
    %v280 = vld [vmem:[%s4 + $0x18] sm:$0xff]
    %282 = vset.pattern.permute.xlu0 0
    %283 = vperm.xlu0 %282, %v277
    %v284 = vpop.permute.xlu0 %283
    %287 = vset.pattern.permute.xlu0 0
    %288 = vperm.xlu0 %287, %v278
    %v289 = vpop.permute.xlu0 %288
    %292 = vset.pattern.permute.xlu0 0
    %293 = vperm.xlu0 %292, %v279
    %v294 = vpop.permute.xlu0 %293
    %297 = vset.pattern.permute.xlu0 0
    %298 = vperm.xlu0 %297, %v280
    %v299 = vpop.permute.xlu0 %298
    %vm301 = vcmask 785408
    %v303 = vsel %vm301, %v213, 0
    %v306 = vsel %vm301, %v214, 0
    %v309 = vsel %vm301, %v215, 0
    %v312 = vsel %vm301, %v216, 0
    %314 = vmatprep.subr.mxu0 0.0
    %315 = vmatpush1.msra.mxu0 %v209
    %316 = vmatprep.subr.mxu0 0.0
    %317 = vmatpush1.msra.mxu0 %v210
    %318 = vmatprep.subr.mxu0 0.0
    %319 = vmatpush1.msra.mxu0 %v211
    %320 = vmatprep.subr.mxu0 0.0
    %321 = vmatpush1.msra.mxu0 %v212
    %322 = vmatprep.subr.mxu0 0.0
    %323 = vmatpush1.msra.mxu0 %v245
    %324 = vmatprep.subr.mxu0 0.0
    %325 = vmatpush1.msra.mxu0 %v246
    %326 = vmatprep.subr.mxu0 0.0
    %327 = vmatpush1.msra.mxu0 %v247
    %328 = vmatprep.subr.mxu0 0.0
    %329 = vmatpush1.msra.mxu0 %v248
    %330 = vmatprep.subr.mxu0 0.0
    %331 = vmatpush1.msra.mxu0 %v273
    %332 = vmatprep.subr.mxu0 0.0
    %333 = vmatpush1.msra.mxu0 %v274
    %334 = vmatprep.subr.mxu0 0.0
    %335 = vmatpush1.msra.mxu0 %v275
    %336 = vmatprep.subr.mxu0 0.0
    %337 = vmatpush1.msra.mxu0 %v276
    %338 = vmatprep.subr.mxu0 0.0
    %339 = vmatpush1.msra.mxu0 0.0
    %340 = vmatprep.subr.mxu0 0.0
    %341 = vmatpush1.msra.mxu0 0.0
    %342 = vmatprep.subr.mxu0 0.0
    %343 = vmatpush1.msra.mxu0 0.0
    %344 = vmatprep.subr.mxu0 0.0
    %345 = vmatpush1.msra.mxu0 0.0
    %346 = vmatprep.subr.mxu0 0.0
    %347 = vmatpush1.msra.mxu0 0.0
    %348 = vmatprep.subr.mxu0 0.0
    %349 = vmatpush1.msra.mxu0 0.0
    %350 = vmatprep.subr.mxu0 0.0
    %351 = vmatpush1.msra.mxu0 0.0
    %352 = vmatprep.subr.mxu0 0.0
    %353 = vmatpush1.msra.mxu0 0.0
    %354 = vmatprep.subr.mxu0 0.0
    %355 = vmatpush1.msra.mxu0 0.0
    %356 = vmatprep.subr.mxu0 0.0
    %357 = vmatpush1.msra.mxu0 0.0
    %358 = vmatprep.subr.mxu0 0.0
    %359 = vmatpush1.msra.mxu0 0.0
    %360 = vmatprep.subr.mxu0 0.0
    %361 = vmatpush1.msra.mxu0 0.0
    %362 = vmatprep.subr.mxu0 0.0
    %363 = vmatpush1.msra.mxu0 0.0
    %364 = vmatprep.subr.mxu0 0.0
    %365 = vmatpush1.msra.mxu0 0.0
    %366 = vmatprep.subr.mxu0 0.0
    %367 = vmatpush1.msra.mxu0 0.0
    %368 = vmatprep.subr.mxu0 0.0
    %369 = vmatpush1.msra.mxu0 0.0
    %370 = vmatprep.subr.mxu0 0.0
    %371 = vmatpush1.msra.mxu0 0.0
    %372 = vmatprep.subr.mxu0 0.0
    %373 = vmatpush1.msra.mxu0 0.0
    %374 = vmatprep.subr.mxu0 0.0
    %375 = vmatpush1.msra.mxu0 0.0
    %376 = vmatprep.subr.mxu0 0.0
    %377 = vmatpush1.msra.mxu0 0.0
    %378 = vmatprep.mubr.f32.mxu0 0.0
    %379 = vmatmul.mubr.f32.gmra.mrb[0].mxu0 %v303
    %v380 = vpop.f32.mrb[0].mxu0
    %v381 = vadd.f32 %v284, %v380
    %v382 = vpop.f32.mrb[0].mxu0
    %383 = vmatprep.mubr.f32.mxu0 0.0
    %384 = vmatmul.mubr.f32.gmra.mrb[0].mxu0 %v306
    %v385 = vpop.f32.mrb[0].mxu0
    %v386 = vadd.f32 %v289, %v385
    %v387 = vpop.f32.mrb[0].mxu0
    %388 = vmatprep.mubr.f32.mxu0 0.0
    %389 = vmatmul.mubr.f32.gmra.mrb[0].mxu0 %v309
    %v390 = vpop.f32.mrb[0].mxu0
    %v391 = vadd.f32 %v294, %v390
    %v392 = vpop.f32.mrb[0].mxu0
    %393 = vmatprep.mubr.f32.mxu0 0.0
    %394 = vmatmul.mubr.f32.gmra.mrb[0].mxu0 %v312
    %v395 = vpop.f32.mrb[0].mxu0
    %v396 = vadd.f32 %v299, %v395
    %v397 = vpop.f32.mrb[0].mxu0
    %398 = vdwg.mxu0
    %vm399 = vcmp.gt.f32.partialorder %v381, 0.0
    %vm400 = vcmp.gt.f32.partialorder %v386, 0.0
    %vm401 = vcmp.gt.f32.partialorder %v391, 0.0
    %vm402 = vcmp.gt.f32.partialorder %v396, 0.0
    %v403 = vmul.f32 %v381, 0.1
    %v404 = vmul.f32 %v386, 0.1
    %v405 = vmul.f32 %v391, 0.1
    %v406 = vmul.f32 %v396, 0.1
    %v407 = vsel %vm399, %v381, %v403
    %v408 = vsel %vm400, %v386, %v404
    %v409 = vsel %vm401, %v391, %v405
    %v410 = vsel %vm402, %v396, %v406
    %v411 = vld [vmem:[%s5] sm:$0xff]
    %v412 = vld [vmem:[%s5 + $0x8] sm:$0xff]
    %v413 = vld [vmem:[%s5 + $0x10] sm:$0xff]
    %v414 = vld [vmem:[%s5 + $0x18] sm:$0xff]
    %v415 = vld [vmem:[%s6] sm:$0xff]
    %v416 = vld [vmem:[%s6 + $0x8] sm:$0xff]
    %v417 = vld [vmem:[%s6 + $0x10] sm:$0xff]
    %v418 = vld [vmem:[%s6 + $0x18] sm:$0xff]
    %420 = vset.pattern.permute.xlu0 0
    %421 = vperm.xlu0 %420, %v415
    %v422 = vpop.permute.xlu0 %421
    %425 = vset.pattern.permute.xlu0 0
    %426 = vperm.xlu0 %425, %v416
    %v427 = vpop.permute.xlu0 %426
    %430 = vset.pattern.permute.xlu0 0
    %431 = vperm.xlu0 %430, %v417
    %v432 = vpop.permute.xlu0 %431
    %435 = vset.pattern.permute.xlu0 0
    %436 = vperm.xlu0 %435, %v418
    %v437 = vpop.permute.xlu0 %436
    %vm439 = vcmask 261120
    %v441 = vsel %vm439, %v411, 0
    %v444 = vsel %vm439, %v412, 0
    %v447 = vsel %vm439, %v413, 0
    %v450 = vsel %vm439, %v414, 0
    %452 = vmatprep.subr.mxu0 0.0
    %453 = vmatpush1.msra.mxu0 %v407
    %454 = vmatprep.subr.mxu0 0.0
    %455 = vmatpush1.msra.mxu0 %v408
    %456 = vmatprep.subr.mxu0 0.0
    %457 = vmatpush1.msra.mxu0 %v409
    %458 = vmatprep.subr.mxu0 0.0
    %459 = vmatpush1.msra.mxu0 %v410
    %460 = vmatprep.subr.mxu0 0.0
    %461 = vmatpush1.msra.mxu0 0.0
    %462 = vmatprep.subr.mxu0 0.0
    %463 = vmatpush1.msra.mxu0 0.0
    %464 = vmatprep.subr.mxu0 0.0
    %465 = vmatpush1.msra.mxu0 0.0
    %466 = vmatprep.subr.mxu0 0.0
    %467 = vmatpush1.msra.mxu0 0.0
    %468 = vmatprep.subr.mxu0 0.0
    %469 = vmatpush1.msra.mxu0 0.0
    %470 = vmatprep.subr.mxu0 0.0
    %471 = vmatpush1.msra.mxu0 0.0
    %472 = vmatprep.subr.mxu0 0.0
    %473 = vmatpush1.msra.mxu0 0.0
    %474 = vmatprep.subr.mxu0 0.0
    %475 = vmatpush1.msra.mxu0 0.0
    %476 = vmatprep.subr.mxu0 0.0
    %477 = vmatpush1.msra.mxu0 0.0
    %478 = vmatprep.subr.mxu0 0.0
    %479 = vmatpush1.msra.mxu0 0.0
    %480 = vmatprep.subr.mxu0 0.0
    %481 = vmatpush1.msra.mxu0 0.0
    %482 = vmatprep.subr.mxu0 0.0
    %483 = vmatpush1.msra.mxu0 0.0
    %484 = vmatprep.subr.mxu0 0.0
    %485 = vmatpush1.msra.mxu0 0.0
    %486 = vmatprep.subr.mxu0 0.0
    %487 = vmatpush1.msra.mxu0 0.0
    %488 = vmatprep.subr.mxu0 0.0
    %489 = vmatpush1.msra.mxu0 0.0
    %490 = vmatprep.subr.mxu0 0.0
    %491 = vmatpush1.msra.mxu0 0.0
    %492 = vmatprep.subr.mxu0 0.0
    %493 = vmatpush1.msra.mxu0 0.0
    %494 = vmatprep.subr.mxu0 0.0
    %495 = vmatpush1.msra.mxu0 0.0
    %496 = vmatprep.subr.mxu0 0.0
    %497 = vmatpush1.msra.mxu0 0.0
    %498 = vmatprep.subr.mxu0 0.0
    %499 = vmatpush1.msra.mxu0 0.0
    %500 = vmatprep.subr.mxu0 0.0
    %501 = vmatpush1.msra.mxu0 0.0
    %502 = vmatprep.subr.mxu0 0.0
    %503 = vmatpush1.msra.mxu0 0.0
    %504 = vmatprep.subr.mxu0 0.0
    %505 = vmatpush1.msra.mxu0 0.0
    %506 = vmatprep.subr.mxu0 0.0
    %507 = vmatpush1.msra.mxu0 0.0
    %508 = vmatprep.subr.mxu0 0.0
    %509 = vmatpush1.msra.mxu0 0.0
    %510 = vmatprep.subr.mxu0 0.0
    %511 = vmatpush1.msra.mxu0 0.0
    %512 = vmatprep.subr.mxu0 0.0
    %513 = vmatpush1.msra.mxu0 0.0
    %514 = vmatprep.subr.mxu0 0.0
    %515 = vmatpush1.msra.mxu0 0.0
    %516 = vmatprep.mubr.f32.mxu0 0.0
    %517 = vmatmul.mubr.f32.gmra.mrb[0].mxu0 %v441
    %v518 = vpop.f32.mrb[0].mxu0
    %v519 = vadd.f32 %v422, %v518
    %v520 = vpop.f32.mrb[0].mxu0
    %521 = vmatprep.mubr.f32.mxu0 0.0
    %522 = vmatmul.mubr.f32.gmra.mrb[0].mxu0 %v444
    %v523 = vpop.f32.mrb[0].mxu0
    %v524 = vadd.f32 %v427, %v523
    %v525 = vpop.f32.mrb[0].mxu0
    %526 = vmatprep.mubr.f32.mxu0 0.0
    %527 = vmatmul.mubr.f32.gmra.mrb[0].mxu0 %v447
    %v528 = vpop.f32.mrb[0].mxu0
    %v529 = vadd.f32 %v432, %v528
    %v530 = vpop.f32.mrb[0].mxu0
    %531 = vmatprep.mubr.f32.mxu0 0.0
    %532 = vmatmul.mubr.f32.gmra.mrb[0].mxu0 %v450
    %v533 = vpop.f32.mrb[0].mxu0
    %v534 = vadd.f32 %v437, %v533
    %v535 = vpop.f32.mrb[0].mxu0
    %536 = vdwg.mxu0
    %vm537 = vcmask 326656
    %538 = vst.msk [vmem:[#allocation5] sm:$0xff] %vm537, %v519
    %539 = vst.msk [vmem:[#allocation5 + $0x8] sm:$0xff] %vm537, %v524
    %540 = vst.msk [vmem:[#allocation5 + $0x10] sm:$0xff] %vm537, %v529
    %541 = vst.msk [vmem:[#allocation5 + $0x18] sm:$0xff] %vm537, %v534
    // Predicated region
    $region34: #{tpu_custom_call.1} parent=1 // pred_check
      _
    $region35: #{tpu_custom_call.1} parent=1 // pred_check_branch
      %543 = sbr.rel (0) target = $region37
    $region36: #{tpu_custom_call.1} parent=1 // pred_region
      %s545 = ssub.s32 512, 512
      %546 = vsyncadd [#allocation4], %s545
      %s547 = sshll.u32 [#allocation5], 4
      %s548 = int_to_ptr.vmem [resolvable:$true] %s547
      %553 = dma.vmem_to_hbm [thread:$0]  %s548, 512, %s7, [#allocation4], 128, 128, 8
    $region37: #{tpu_custom_call.1} parent=1 // pred_fallthru
      _
    // Predicated region
    $region38: #{tpu_custom_call.1} parent=1 // pred_check
      _
    $region39: #{tpu_custom_call.1} parent=1 // pred_check_branch
      %555 = sbr.rel (0) target = $region41
    $region40: #{tpu_custom_call.1} parent=1 // pred_region
      %556 = dma.done [#allocation4], 512
    $region41: #{tpu_custom_call.1} parent=1 // pred_fallthru
      _
    %557 = vsyncpa [#allocation3], 1
    %558 = vsyncpa [#allocation4], 1

</llo_original>
